<compile_context>
chip_gen: v7x
topology: tpu7x:2x2x1
jax: 0.10.0
libtpu: 0.0.40
codegen_flags: <defaults>
</compile_context>

<pallas_src>
import math

import jax
import jax.numpy as jnp
from jax.experimental import pallas as pl
from jax.experimental.pallas import tpu as pltpu

_TILE_BYTES = 2 << 20     # ~2 MiB per-array row tile
_VMEM_LIMIT = 48 << 20    # raised scoped-VMEM limit; < 64 MiB v7x physical


def _round_up(x, m):
    return (x + m - 1) // m * m


def _choose_cols(n):
    """Pick a lane-dense last dim.  Prefer a zero-pad layout."""
    for c in (512, 256, 128):            # no pad AND rows a multiple of 8
        if n % (c * 8) == 0:
            return c, 0
    for c in (512, 256, 128):            # no pad
        if n % c == 0:
            return c, 0
    pad = (-n) % (128 * 8)               # ragged: small tail pad only
    return 128, pad


def _choose_tile_rows(rows, cols, itemsize, granule):
    """Row-tile size: ~_TILE_BYTES per array, multiple of `granule` sublanes."""
    target = max(granule, (_TILE_BYTES // (cols * itemsize)) // granule * granule)
    if rows <= target:
        # Whole tensor fits in one row tile; if big enough, split in two so
        # dimension_semantics=("parallel", ...) can feed both v7x TensorCores.
        if rows >= 2 * granule and rows % granule == 0:
            return min(rows, _round_up((rows + 1) // 2, granule))
        return rows                       # full-dim block: always legal
    return target                         # partial last block handled by Pallas


def _if_node_kernel(thr_ref, x_ref, mem_in_ref, spike_ref, mem_out_ref):
    """One (row-tile, timestep) grid point of the IF node.

    mem_out_ref is VMEM-resident across the whole T axis (its index_map
    ignores t): init from mem_in at t == 0, updated in place every step,
    written back to HBM once per row tile.
    """
    t = pl.program_id(1)

    @pl.when(t == 0)
    def _():
        mem_out_ref[...] = mem_in_ref[...]

    thr = thr_ref[0]
    mem = mem_out_ref[...] + x_ref[...]                 # integral
    fired = mem >= thr                                  # calc_spike
    spike_ref[...] = fired.astype(spike_ref.dtype)
    mem_out_ref[...] = jnp.where(fired, 0.0, mem).astype(mem_out_ref.dtype)


def base_node_multi_step(x_seq, mem=0.0, *, threshold=1.0, spike_dtype=None):
    """Fused multi-timestep IF-node forward.

    x_seq: [T, *shape]; mem: [*shape] (or scalar initial state, e.g. 0.0).
    Returns (spike_seq [T, *shape] in `spike_dtype`, new_mem [*shape]).
    """
    T = x_seq.shape[0]
    shape = x_seq.shape[1:]
    dtype = x_seq.dtype
    spike_dtype = dtype if spike_dtype is None else jnp.dtype(spike_dtype)
    n = math.prod(shape)

    mem = jnp.asarray(mem, dtype)
    if mem.shape != shape:
        mem = jnp.broadcast_to(mem, shape)

    cols, pad = _choose_cols(n)
    rows = (n + pad) // cols
    granule = 8 if jnp.dtype(spike_dtype).itemsize >= 4 else 32
    tile_rows = _choose_tile_rows(rows, cols, jnp.dtype(dtype).itemsize, granule)
    grid_rows = pl.cdiv(rows, tile_rows)

    x2 = x_seq.reshape(T, n)
    m1 = mem.reshape(n)
    if pad:
        # Only for ragged sizes; zero padding is inert and sliced off below.
        x2 = jnp.pad(x2, ((0, 0), (0, pad)))
        m1 = jnp.pad(m1, (0, pad))
    x3 = x2.reshape(T, rows, cols)
    m2 = m1.reshape(rows, cols)
    thr = jnp.full((1,), threshold, jnp.float32)

    seq_spec = pl.BlockSpec((None, tile_rows, cols), lambda i, t: (t, i, 0))
    state_spec = pl.BlockSpec((tile_rows, cols), lambda i, t: (i, 0))

    spike3, mem_out2 = pl.pallas_call(
        _if_node_kernel,
        out_shape=(
            jax.ShapeDtypeStruct((T, rows, cols), spike_dtype),
            jax.ShapeDtypeStruct((rows, cols), dtype),
        ),
        grid=(grid_rows, T),
        in_specs=[
            pl.BlockSpec(memory_space=pltpu.MemorySpace.SMEM),   # threshold
            seq_spec,                                            # x_t
            state_spec,                                          # initial mem
        ],
        out_specs=(seq_spec, state_spec),
        compiler_params=pltpu.CompilerParams(
            dimension_semantics=("parallel", "arbitrary"),
            vmem_limit_bytes=_VMEM_LIMIT,
        ),
    )(thr, x3, m2)

    if pad:
        spike_seq = spike3.reshape(T, rows * cols)[:, :n].reshape((T,) + shape)
        new_mem = mem_out2.reshape(rows * cols)[:n].reshape(shape)
    else:
        spike_seq = spike3.reshape((T,) + shape)
        new_mem = mem_out2.reshape(shape)
    return spike_seq, new_mem


def base_node_forward(inputs, mem=0.0, *, threshold=1.0, weight_warmup=False,
                      spike_dtype=None):
    """Single-step forward matching BaseNode.forward (IF concretization)."""
    if weight_warmup:
        return inputs, mem
    spike_seq, new_mem = base_node_multi_step(
        inputs[None], mem, threshold=threshold, spike_dtype=spike_dtype)
    return spike_seq[0], new_mem


def _reference_steps(x_seq, mem, threshold=1.0):
    m = jnp.broadcast_to(jnp.asarray(mem, x_seq.dtype), x_seq.shape[1:])
    spikes = []
    for t in range(x_seq.shape[0]):
        m = m + x_seq[t]
        fired = m >= threshold
        spikes.append(fired.astype(x_seq.dtype))
        m = jnp.where(fired, 0.0, m)
    return jnp.stack(spikes), m


if __name__ == "__main__":
    key = jax.random.PRNGKey(0)
    k1, k2, k3, k4, k5 = jax.random.split(key, 5)

    # Case 1: single step, lane-friendly size (no-pad fast path).
    B, C, H, W = 2, 4, 16, 16
    x = jax.random.normal(k1, (B, C, H, W), dtype=jnp.float32) * 2.0
    mem0 = jnp.zeros((B, C, H, W), jnp.float32)
    spike, mem1 = base_node_forward(x, mem0, threshold=1.0)
    jax.block_until_ready((spike, mem1))
    ref_s, ref_m = _reference_steps(x[None], mem0, 1.0)
    assert jnp.allclose(spike, ref_s[0]), "spike mismatch (case 1)"
    assert jnp.allclose(mem1, ref_m), "mem mismatch (case 1)"

    # Case 2: ragged spatial size (7x7) exercises the pad path, nonzero state.
    x2 = jax.random.normal(k2, (2, 4, 7, 7), dtype=jnp.float32) * 2.0
    m2 = jax.random.uniform(k3, (2, 4, 7, 7), dtype=jnp.float32)
    spike2, mem2 = base_node_forward(x2, m2, threshold=1.0)
    jax.block_until_ready((spike2, mem2))
    ref_s2, ref_m2 = _reference_steps(x2[None], m2, 1.0)
    assert jnp.allclose(spike2, ref_s2[0]), "spike mismatch (case 2)"
    assert jnp.allclose(mem2, ref_m2), "mem mismatch (case 2)"

    # Case 3: fused multi-timestep path (membrane carried in VMEM across T).
    T = 4
    xs = jax.random.normal(k4, (T, B, C, H, W), dtype=jnp.float32)
    m3 = jax.random.uniform(k5, (B, C, H, W), dtype=jnp.float32)
    spike_seq, mem3 = base_node_multi_step(xs, m3, threshold=1.0)
    jax.block_until_ready((spike_seq, mem3))
    ref_ss, ref_mm = _reference_steps(xs, m3, 1.0)
    assert jnp.allclose(spike_seq, ref_ss), "spike mismatch (case 3)"
    assert jnp.allclose(mem3, ref_mm), "mem mismatch (case 3)"

    # Case 4: multi-timestep with int8 spikes (reduced HBM writeback).
    xs4 = jax.random.normal(k1, (3, 2, 8, 32, 32), dtype=jnp.float32)
    spike_i8, mem4 = base_node_multi_step(xs4, 0.0, threshold=1.0,
                                          spike_dtype=jnp.int8)
    jax.block_until_ready((spike_i8, mem4))
    ref_s4, ref_m4 = _reference_steps(xs4, 0.0, 1.0)
    assert jnp.array_equal(spike_i8, ref_s4.astype(jnp.int8)), \
        "spike mismatch (case 4, int8)"
    assert jnp.allclose(mem4, ref_m4), "mem mismatch (case 4)"

    # weight_warmup path: identity.
    warm, warm_mem = base_node_forward(x, mem0, weight_warmup=True)
    assert jnp.allclose(warm, x)
    assert jnp.allclose(warm_mem, mem0)

    print("KERNEL_OK")
</pallas_src>

<mosaic_0001>
module attributes {stable_mosaic.version = 11 : i64} {
  func.func @_if_node_kernel(%arg0: i32, %arg1: i32, %arg2: memref<1xf32, #tpu.memory_space<smem>>, %arg3: memref<1x8x256xf32, #tpu.memory_space<vmem>>, %arg4: memref<8x256xf32, #tpu.memory_space<vmem>>, %arg5: memref<1x8x256xf32, #tpu.memory_space<vmem>>, %arg6: memref<8x256xf32, #tpu.memory_space<vmem>>) attributes {dimension_semantics = [#tpu.dimension_semantics<parallel>, #tpu.dimension_semantics<arbitrary>], iteration_bounds = array<i64: 1, 1>, scalar_prefetch = 0 : i64, scratch_operands = 0 : i64, tpu.core_type = #tpu.core_type<tc>, window_params = [{transform_indices = @transform_0, window_bounds = array<i64: 1>}, {transform_indices = @transform_1, window_bounds = array<i64: 1, 8, 256>}, {transform_indices = @transform_2, window_bounds = array<i64: 8, 256>}, {transform_indices = @transform_3, window_bounds = array<i64: 1, 8, 256>}, {transform_indices = @transform_4, window_bounds = array<i64: 8, 256>}]} {
    %c0_i32 = arith.constant 0 : i32
    %0 = arith.cmpi eq, %arg1, %c0_i32 : i32
    %1 = arith.extui %0 : i1 to i32
    %c0_i32_0 = arith.constant 0 : i32
    %2 = arith.cmpi ne, %1, %c0_i32_0 : i32
    scf.if %2 {
      %c0_11 = arith.constant 0 : index
      %c0_12 = arith.constant 0 : index
      %18 = vector.load %arg4[%c0_11, %c0_12] : memref<8x256xf32, #tpu.memory_space<vmem>>, vector<8x256xf32>
      %c0_13 = arith.constant 0 : index
      %c0_14 = arith.constant 0 : index
      %19 = vector.load %arg6[%c0_13, %c0_14] : memref<8x256xf32, #tpu.memory_space<vmem>>, vector<8x256xf32>
      tpu.vector_store %arg6[%c0_13, %c0_14], %18 {strides = array<i32>} : memref<8x256xf32, #tpu.memory_space<vmem>>, vector<8x256xf32>,
    } else {
    }
    %c0 = arith.constant 0 : index
    %3 = memref.load %arg2[%c0] : memref<1xf32, #tpu.memory_space<smem>>
    %c0_1 = arith.constant 0 : index
    %c0_2 = arith.constant 0 : index
    %4 = vector.load %arg6[%c0_1, %c0_2] : memref<8x256xf32, #tpu.memory_space<vmem>>, vector<8x256xf32>
    %c0_3 = arith.constant 0 : index
    %c0_4 = arith.constant 0 : index
    %c0_5 = arith.constant 0 : index
    %5 = vector.load %arg3[%c0_3, %c0_4, %c0_5] : memref<1x8x256xf32, #tpu.memory_space<vmem>>, vector<1x8x256xf32>
    %6 = vector.shape_cast %5 : vector<1x8x256xf32> to vector<8x256xf32>
    %7 = arith.addf %4, %6 : vector<8x256xf32>
    %8 = vector.broadcast %3 : f32 to vector<8x256xf32>
    %9 = arith.cmpf oge, %7, %8 : vector<8x256xf32>
    %10 = arith.extui %9 : vector<8x256xi1> to vector<8x256xi32>
    %11 = arith.sitofp %10 : vector<8x256xi32> to vector<8x256xf32>
    %c0_6 = arith.constant 0 : index
    %c0_7 = arith.constant 0 : index
    %c0_8 = arith.constant 0 : index
    %12 = vector.load %arg5[%c0_6, %c0_7, %c0_8] : memref<1x8x256xf32, #tpu.memory_space<vmem>>, vector<1x8x256xf32>
    %13 = vector.shape_cast %12 : vector<1x8x256xf32> to vector<8x256xf32>
    %14 = vector.shape_cast %11 : vector<8x256xf32> to vector<1x8x256xf32>
    tpu.vector_store %arg5[%c0_6, %c0_7, %c0_8], %14 {strides = array<i32>} : memref<1x8x256xf32, #tpu.memory_space<vmem>>, vector<1x8x256xf32>,
    %cst = arith.constant 0.000000e+00 : f32
    %15 = vector.broadcast %cst : f32 to vector<8x256xf32>
    %16 = arith.select %9, %15, %7 : vector<8x256xi1>, vector<8x256xf32>
    %c0_9 = arith.constant 0 : index
    %c0_10 = arith.constant 0 : index
    %17 = vector.load %arg6[%c0_9, %c0_10] : memref<8x256xf32, #tpu.memory_space<vmem>>, vector<8x256xf32>
    tpu.vector_store %arg6[%c0_9, %c0_10], %16 {strides = array<i32>} : memref<8x256xf32, #tpu.memory_space<vmem>>, vector<8x256xf32>,
    return
  }
  func.func @transform_0(%arg0: i32, %arg1: i32) -> i32 {
    %c0_i32 = arith.constant 0 : i32
    %c0_i32_0 = arith.constant 0 : i32
    return %c0_i32 : i32
  }
  func.func @transform_1(%arg0: i32, %arg1: i32) -> (i32, i32, i32) {
    %c0_i32 = arith.constant 0 : i32
    %c0_i32_0 = arith.constant 0 : i32
    return %arg1, %arg0, %c0_i32 : i32, i32, i32
  }
  func.func @transform_2(%arg0: i32, %arg1: i32) -> (i32, i32) {
    %c0_i32 = arith.constant 0 : i32
    %c0_i32_0 = arith.constant 0 : i32
    return %arg0, %c0_i32 : i32, i32
  }
  func.func @transform_3(%arg0: i32, %arg1: i32) -> (i32, i32, i32) {
    %c0_i32 = arith.constant 0 : i32
    %c0_i32_0 = arith.constant 0 : i32
    return %arg1, %arg0, %c0_i32 : i32, i32, i32
  }
  func.func @transform_4(%arg0: i32, %arg1: i32) -> (i32, i32) {
    %c0_i32 = arith.constant 0 : i32
    %c0_i32_0 = arith.constant 0 : i32
    return %arg0, %c0_i32 : i32, i32
  }
}

</mosaic_0001>

<llo_original>
// kernel: tpu_custom_call.1
$region0: #{tpu_custom_call.1}
  #allocation0 [shape = 'u32[]', space=smem, size = 0x4, offset = 0x4, fixed_abs, tag = 'smem constant byte address 0x4 - core index']
  #allocation1 [shape = 'u32[144,128]{1,0:T(1,128)}', space=vmem, size = 0x12000, scoped, tag = 'internal scratch']
  #allocation2 [shape = 'f32[1]{0:T(128)S(6)}', space=smem, size = 0x200, scoped, tag = 'scoped memory for tpu_custom_call.1']
  %s0 = inlined_call_operand.<no memory space> [shape: f32[1], index: 0, kind: input, shape index: {}]
  %s1 = inlined_call_operand.hbm [shape: f32[1,8,256], index: 1, kind: input, shape index: {}]
  %s2 = inlined_call_operand.hbm [shape: f32[8,256], index: 2, kind: input, shape index: {}]
  %s3 = inlined_call_operand.hbm [shape: f32[1,8,256], index: 3, kind: output, shape index: {0}]
  %s4 = inlined_call_operand.hbm [shape: f32[8,256], index: 4, kind: output, shape index: {1}]
  %5 = xla_tuple %s3, %s4
  %s6 = sld [smem:[#allocation0]]
  $region42: #{tpu_custom_call.1} parent=0
    _
  %s8 = ssub.s32 1, %s6
  %s9 = scalar_select 0, %s8, %s6
  %10 = sst [smem:[#allocation2]] %s0
  $region1: #{tpu_custom_call.1} parent=0
    #allocation3 [shape = 'u8[8192]{0}', space=vmem, size = 0x2000, scoped, tag = 'input window, operand 1, single buffered']
    #allocation4 [shape = 's32[1]{0}', space=sflag, size = 0x4, scoped, tag = 'scoped memory for tpu_custom_call.1']
    #allocation5 [shape = 's32[1]{0}', space=sflag, size = 0x4, scoped, tag = 'scoped memory for tpu_custom_call.1']
    #allocation6 [shape = 'u8[8192]{0}', space=vmem, size = 0x2000, scoped, tag = 'input window, operand 2, single buffered']
    #allocation7 [shape = 's32[1]{0}', space=sflag, size = 0x4, scoped, tag = 'scoped memory for tpu_custom_call.1']
    #allocation8 [shape = 'u8[8192]{0}', space=vmem, size = 0x2000, scoped, tag = 'output window, operand 0, single buffered']
    #allocation9 [shape = 'u8[8192]{0}', space=vmem, size = 0x2000, scoped, tag = 'output window, operand 1, single buffered']
    #allocation10 [shape = 's32[1]{0}', space=sflag, size = 0x4, scoped, tag = 'scoped memory for tpu_custom_call.1']
    %11 = vsyncpa [#allocation4], 0
    %12 = vsyncpa [#allocation7], 0
    %13 = vsyncpa [#allocation5], 0
    %14 = vsyncpa [#allocation10], 0
    // Predicated region
    $region2: #{tpu_custom_call.1} parent=1 // pred_check
      _
    $region3: #{tpu_custom_call.1} parent=1 // pred_check_branch
      %16 = sbr.rel (0) target = $region5
    $region4: #{tpu_custom_call.1} parent=1 // pred_region
      _
    $region5: #{tpu_custom_call.1} parent=1 // pred_fallthru
      _
    // Predicated region
    $region6: #{tpu_custom_call.1} parent=1 // pred_check
      _
    $region7: #{tpu_custom_call.1} parent=1 // pred_check_branch
      %18 = sbr.rel (0) target = $region9
    $region8: #{tpu_custom_call.1} parent=1 // pred_region
      %s20 = ssub.s32 256, 256
      %21 = vsyncadd [#allocation4], %s20
      %s23 = sshll.u32 [#allocation3], 4
      %s24 = int_to_ptr.vmem [resolvable:$true] %s23
      %26 = dma.hbm_to_vmem [thread:$0]  %s1, 256, %s24, [#allocation4]
    $region9: #{tpu_custom_call.1} parent=1 // pred_fallthru
      _
    // Predicated region
    $region10: #{tpu_custom_call.1} parent=1 // pred_check
      _
    $region11: #{tpu_custom_call.1} parent=1 // pred_check_branch
      %28 = sbr.rel (0) target = $region13
    $region12: #{tpu_custom_call.1} parent=1 // pred_region
      %s30 = ssub.s32 256, 256
      %31 = vsyncadd [#allocation7], %s30
      %s33 = sshll.u32 [#allocation6], 4
      %s34 = int_to_ptr.vmem [resolvable:$true] %s33
      %36 = dma.hbm_to_vmem [thread:$0]  %s2, 256, %s34, [#allocation7]
    $region13: #{tpu_custom_call.1} parent=1 // pred_fallthru
      _
    // Predicated region
    $region14: #{tpu_custom_call.1} parent=1 // pred_check
      _
    $region15: #{tpu_custom_call.1} parent=1 // pred_check_branch
      %38 = sbr.rel (0) target = $region17
    $region16: #{tpu_custom_call.1} parent=1 // pred_region
      %39 = dma.done [#allocation4], 256
    $region17: #{tpu_custom_call.1} parent=1 // pred_fallthru
      _
    // Predicated region
    $region18: #{tpu_custom_call.1} parent=1 // pred_check
      _
    $region19: #{tpu_custom_call.1} parent=1 // pred_check_branch
      %41 = sbr.rel (0) target = $region21
    $region20: #{tpu_custom_call.1} parent=1 // pred_region
      %42 = dma.done [#allocation7], 256
    $region21: #{tpu_custom_call.1} parent=1 // pred_fallthru
      _
    %p43 = scmp.eq.s32.totalorder 0, 0
    // Predicated region
    $region22: #{tpu_custom_call.1} parent=1 // pred_check
      %p44 = pneg %p43
    $region23: #{tpu_custom_call.1} parent=1 // pred_check_branch
      %46 = sbr.rel (%p44) target = $region25
    $region24: #{tpu_custom_call.1} parent=1 // pred_region
      %v47 = vld [vmem:[#allocation6] sm:$0xff]
      %v48 = vld [vmem:[#allocation6 + $0x8] sm:$0xff]
      %49 = vst [vmem:[#allocation9] sm:$0xff] %v47
      %50 = vst [vmem:[#allocation9 + $0x8] sm:$0xff] %v48
    $region25: #{tpu_custom_call.1} parent=1 // pred_fallthru
      _
    %s51 = sld [smem:[#allocation2]]
    %v52 = vld [vmem:[#allocation9] sm:$0xff]
    %v53 = vld [vmem:[#allocation9 + $0x8] sm:$0xff]
    %v54 = vld [vmem:[#allocation3] sm:$0xff]
    %v55 = vld [vmem:[#allocation3 + $0x8] sm:$0xff]
    %v56 = vadd.f32 %v52, %v54
    %v57 = vadd.f32 %v53, %v55
    %v58 = vstv %s51
    %vm59 = vcmp.ge.f32.partialorder %v56, %v58
    %vm60 = vcmp.ge.f32.partialorder %v57, %v58
    %v61 = vsel %vm59, 1, 0
    %v62 = vsel %vm60, 1, 0
    %v63 = vcvt.s32.f32 %v61
    %v64 = vcvt.s32.f32 %v62
    %65 = vst [vmem:[#allocation8] sm:$0xff] %v63
    %66 = vst [vmem:[#allocation8 + $0x8] sm:$0xff] %v64
    %v67 = vsel %vm59, 0.0, %v56
    %v68 = vsel %vm60, 0.0, %v57
    %69 = vst [vmem:[#allocation9] sm:$0xff] %v67
    %70 = vst [vmem:[#allocation9 + $0x8] sm:$0xff] %v68
    // Predicated region
    $region26: #{tpu_custom_call.1} parent=1 // pred_check
      _
    $region27: #{tpu_custom_call.1} parent=1 // pred_check_branch
      %72 = sbr.rel (0) target = $region29
    $region28: #{tpu_custom_call.1} parent=1 // pred_region
      %s74 = ssub.s32 256, 256
      %75 = vsyncadd [#allocation5], %s74
      %s77 = sshll.u32 [#allocation8], 4
      %s78 = int_to_ptr.vmem [resolvable:$true] %s77
      %80 = dma.vmem_to_hbm [thread:$0]  %s78, 256, %s3, [#allocation5]
    $region29: #{tpu_custom_call.1} parent=1 // pred_fallthru
      _
    // Predicated region
    $region30: #{tpu_custom_call.1} parent=1 // pred_check
      _
    $region31: #{tpu_custom_call.1} parent=1 // pred_check_branch
      %82 = sbr.rel (0) target = $region33
    $region32: #{tpu_custom_call.1} parent=1 // pred_region
      %s84 = ssub.s32 256, 256
      %85 = vsyncadd [#allocation10], %s84
      %s87 = sshll.u32 [#allocation9], 4
      %s88 = int_to_ptr.vmem [resolvable:$true] %s87
      %90 = dma.vmem_to_hbm [thread:$0]  %s88, 256, %s4, [#allocation10]
    $region33: #{tpu_custom_call.1} parent=1 // pred_fallthru
      _
    // Predicated region
    $region34: #{tpu_custom_call.1} parent=1 // pred_check
      _
    $region35: #{tpu_custom_call.1} parent=1 // pred_check_branch
      %92 = sbr.rel (0) target = $region37
    $region36: #{tpu_custom_call.1} parent=1 // pred_region
      %93 = dma.done [#allocation5], 256
    $region37: #{tpu_custom_call.1} parent=1 // pred_fallthru
      _
    // Predicated region
    $region38: #{tpu_custom_call.1} parent=1 // pred_check
      _
    $region39: #{tpu_custom_call.1} parent=1 // pred_check_branch
      %95 = sbr.rel (0) target = $region41
    $region40: #{tpu_custom_call.1} parent=1 // pred_region
      %96 = dma.done [#allocation10], 256
    $region41: #{tpu_custom_call.1} parent=1 // pred_fallthru
      _
    %97 = vsyncpa [#allocation4], 1
    %98 = vsyncpa [#allocation7], 1
    %99 = vsyncpa [#allocation5], 1
    %100 = vsyncpa [#allocation10], 1

</llo_original>
